<compile_context>
chip_gen: v6e
topology: v6e:2x2x1
jax: 0.10.0
libtpu: 0.0.40
codegen_flags: <defaults>
</compile_context>

<pallas_src>
import functools

import jax
import jax.numpy as jnp
import numpy as np
from jax.experimental import pallas as pl
from jax.experimental.pallas import tpu as pltpu


def _round_up(x, m):
    return ((x + m - 1) // m) * m


# ----------------------------- Pallas kernels ------------------------------


def _mm_kernel(x_ref, w_ref, b_ref, o_ref, *, relu):
    # (tm, K) @ (K, N) on the MXU (bf16 in, f32 acc), folded-BN bias, ReLU.
    acc = jnp.dot(x_ref[...], w_ref[...], preferred_element_type=jnp.float32)
    acc = acc + b_ref[...]
    if relu:
        acc = jnp.maximum(acc, 0.0)
    o_ref[...] = acc.astype(o_ref.dtype)


def _mm_res_kernel(x_ref, w_ref, b_ref, r_ref, o_ref):
    # conv3 + bn3 + identity residual + ReLU, fused.
    acc = jnp.dot(x_ref[...], w_ref[...], preferred_element_type=jnp.float32)
    acc = acc + b_ref[...] + r_ref[...].astype(jnp.float32)
    o_ref[...] = jnp.maximum(acc, 0.0).astype(o_ref.dtype)


def _mm_dualres_kernel(x_ref, w_ref, b_ref, r_ref, rw_ref, o_ref):
    # conv3 + bn3 + (downsample 1x1 conv + bn fused as a second dot) + ReLU.
    acc = jnp.dot(x_ref[...], w_ref[...], preferred_element_type=jnp.float32)
    acc = acc + jnp.dot(r_ref[...], rw_ref[...], preferred_element_type=jnp.float32)
    acc = acc + b_ref[...]
    o_ref[...] = jnp.maximum(acc, 0.0).astype(o_ref.dtype)


def _conv3x3_kernel(*refs, n_phase, taps, tm, n_row_tiles):
    # 3x3 conv as 9 accumulated tap matmuls over stride-phase slabs resident
    # in VMEM.  Each tap reads a (tm, Cb) window at a small constant flat
    # offset inside the phase slab; no im2col buffer ever touches HBM.
    phase_refs = refs[:n_phase]
    w_ref = refs[n_phase]          # (9, Cb, Cb)  BN-scale folded
    b_ref = refs[n_phase + 1]      # (1, Cb)
    o_ref = refs[n_phase + 2]      # (tm, Cb)

    if n_row_tiles == 1:
        base = 0                                   # fully static slicing
    else:
        base = pl.program_id(1) * tm

    acc = jnp.zeros(o_ref.shape, jnp.float32)
    for t, (q, off) in enumerate(taps):            # 9 taps, unrolled at trace
        xt = phase_refs[q][pl.ds(base + off, tm), :]
        acc = acc + jnp.dot(xt, w_ref[t], preferred_element_type=jnp.float32)
    acc = acc + b_ref[...]
    o_ref[...] = jnp.maximum(acc, 0.0).astype(o_ref.dtype)


# --------------------------- Pallas call wrappers ---------------------------


def matmul_bn(x2d, w, bias, *, relu, residual=None, res_w=None,
              out_dtype=jnp.bfloat16):
    """y = relu?((x2d @ w) + bias [+ residual | + residual @ res_w])."""
    m, k = x2d.shape
    ncol = w.shape[1]

    tm = min(512, _round_up(m, 16))          # big row tiles; 16 for bf16 packing
    mpad = _round_up(m, tm)
    grid = (mpad // tm,)

    def pad_rows(a):
        if a.shape[0] == mpad:
            return a
        return jnp.pad(a, ((0, mpad - a.shape[0]), (0, 0)))

    x_p = pad_rows(x2d).astype(jnp.bfloat16)
    w_b = w.astype(jnp.bfloat16)
    bias2 = bias.reshape(1, ncol).astype(jnp.float32)

    in_specs = [
        pl.BlockSpec((tm, k), lambda i: (i, 0)),      # streaming activations
        pl.BlockSpec((k, ncol), lambda i: (0, 0)),    # weight, VMEM resident
        pl.BlockSpec((1, ncol), lambda i: (0, 0)),    # folded BN bias
    ]
    args = [x_p, w_b, bias2]

    if residual is not None and res_w is not None:
        kernel = _mm_dualres_kernel
        kr = res_w.shape[0]
        args += [pad_rows(residual).astype(jnp.bfloat16),
                 res_w.astype(jnp.bfloat16)]
        in_specs += [pl.BlockSpec((tm, kr), lambda i: (i, 0)),
                     pl.BlockSpec((kr, ncol), lambda i: (0, 0))]
    elif residual is not None:
        kernel = _mm_res_kernel
        args += [pad_rows(residual).astype(jnp.bfloat16)]
        in_specs += [pl.BlockSpec((tm, ncol), lambda i: (i, 0))]
    else:
        kernel = functools.partial(_mm_kernel, relu=relu)

    out = pl.pallas_call(
        kernel,
        out_shape=jax.ShapeDtypeStruct((mpad, ncol), out_dtype),
        grid=grid,
        in_specs=in_specs,
        out_specs=pl.BlockSpec((tm, ncol), lambda i: (i, 0)),
        compiler_params=pltpu.CompilerParams(dimension_semantics=("parallel",)),
    )(*args)
    return out[:m]


def conv3x3_bn_relu(y1, conv2_w, scale, bias, stride):
    """3x3 conv (pad=1, stride) + folded BN + ReLU without im2col in HBM."""
    n, h, w_, cb = y1.shape
    s = stride
    ho = (h + 2 - 3) // s + 1
    wo = (w_ + 2 - 3) // s + 1

    shift = 2 // s                     # max integer shift of a tap in a phase
    wc = wo + shift                    # per-phase row width (incl. garbage cols)
    mimg = ho * wc                     # flattened output rows per image
    tm = min(512, _round_up(mimg, 16))
    mpad = _round_up(mimg, tm)
    n_row_tiles = mpad // tm
    off_max = shift * wc + shift
    lflat = _round_up(mpad + off_max, wc)
    hc = lflat // wc

    # stride-phase decomposition of the padded input (pure repartition).
    xp = jnp.pad(y1.astype(jnp.float32), ((0, 0), (1, 1), (1, 1), (0, 0)))
    phases = []
    for py in range(s):
        for px in range(s):
            ph = xp[:, py::s, px::s, :]
            ph = ph[:, :hc, :wc, :]
            ph = jnp.pad(ph, ((0, 0), (0, hc - ph.shape[1]),
                              (0, wc - ph.shape[2]), (0, 0)))
            phases.append(ph.reshape(n, hc * wc, cb))

    # taps: (phase index, flat offset) + BN-scaled weight per tap.
    taps, wt = [], []
    for dy in range(3):
        for dx in range(3):
            taps.append(((dy % s) * s + (dx % s), (dy // s) * wc + (dx // s)))
            wt.append(jnp.transpose(conv2_w[:, :, dy, dx]) * scale[None, :])
    w_taps = jnp.stack(wt, axis=0).astype(jnp.float32)          # (9, Cb, Cb)
    bias2 = bias.reshape(1, cb).astype(jnp.float32)

    n_phase = s * s
    kernel = functools.partial(_conv3x3_kernel, n_phase=n_phase,
                               taps=tuple(taps), tm=tm, n_row_tiles=n_row_tiles)

    in_specs = [pl.BlockSpec((None, hc * wc, cb), lambda b, i: (b, 0, 0))
                for _ in range(n_phase)]                        # resident per image
    in_specs += [pl.BlockSpec((9, cb, cb), lambda b, i: (0, 0, 0)),
                 pl.BlockSpec((1, cb), lambda b, i: (0, 0))]

    out = pl.pallas_call(
        kernel,
        out_shape=jax.ShapeDtypeStruct((n, mpad, cb), jnp.bfloat16),
        grid=(n, n_row_tiles),
        in_specs=in_specs,
        out_specs=pl.BlockSpec((None, tm, cb), lambda b, i: (b, i, 0)),
        compiler_params=pltpu.CompilerParams(
            dimension_semantics=("parallel", "arbitrary")),
    )(*phases, w_taps, bias2)

    # crop the garbage columns / padded rows and flatten to (N*Ho*Wo, Cb).
    y2 = out[:, :mimg, :].reshape(n, ho, wc, cb)[:, :, :wo, :]
    return y2.reshape(n * ho * wo, cb), ho, wo


# ------------------------------- JAX glue ----------------------------------


def bn_fold(gamma, beta, mean, var, eps=1e-5):
    scale = gamma / jnp.sqrt(var + eps)
    bias = beta - mean * scale
    return scale, bias


def bottleneck_forward(x_nchw, p, stride):
    """Pallas implementation of Bottleneck.forward. Input/output are NCHW f32."""
    x = jnp.transpose(x_nchw, (0, 2, 3, 1)).astype(jnp.float32)   # NHWC
    n, h, w_, cin = x.shape
    cb = p["conv1_w"].shape[0]
    cout = p["conv3_w"].shape[0]
    x_bf = x.astype(jnp.bfloat16)

    # conv1 (1x1) + bn1 + relu
    s1, b1 = bn_fold(p["bn1_g"], p["bn1_b"], p["bn1_m"], p["bn1_v"])
    w1 = p["conv1_w"].reshape(cb, cin).T * s1[None, :]
    y1 = matmul_bn(x_bf.reshape(n * h * w_, cin), w1, b1, relu=True,
                   out_dtype=jnp.float32)
    y1 = y1.reshape(n, h, w_, cb)

    # conv2 (3x3, stride, pad=1) + bn2 + relu  (in-kernel tap accumulation)
    s2, b2 = bn_fold(p["bn2_g"], p["bn2_b"], p["bn2_m"], p["bn2_v"])
    y2, ho, wo = conv3x3_bn_relu(y1, p["conv2_w"], s2, b2, stride)

    # conv3 (1x1) + bn3 + residual + relu  (downsample fused when present)
    s3, b3 = bn_fold(p["bn3_g"], p["bn3_b"], p["bn3_m"], p["bn3_v"])
    w3 = p["conv3_w"].reshape(cout, cb).T * s3[None, :]
    if stride != 1 or cin != cout:
        sd, bd = bn_fold(p["dbn_g"], p["dbn_b"], p["dbn_m"], p["dbn_v"])
        wd = p["down_w"].reshape(cout, cin).T * sd[None, :]
        xs = x_bf[:, ::stride, ::stride, :].reshape(n * ho * wo, cin)
        out2d = matmul_bn(y2, w3, b3 + bd, relu=True,
                          residual=xs, res_w=wd, out_dtype=jnp.float32)
    else:
        ident = x_bf.reshape(n * h * w_, cin)
        out2d = matmul_bn(y2, w3, b3, relu=True,
                          residual=ident, out_dtype=jnp.float32)

    out = out2d.reshape(n, ho, wo, cout)
    return jnp.transpose(out, (0, 3, 1, 2))                      # back to NCHW


# --------------------------- pure-JAX reference -----------------------------


def _conv_ref(x_nhwc, w_torch, stride, pad):
    w_hwio = jnp.transpose(w_torch, (2, 3, 1, 0))
    return jax.lax.conv_general_dilated(
        x_nhwc, w_hwio, window_strides=(stride, stride),
        padding=((pad, pad), (pad, pad)),
        dimension_numbers=("NHWC", "HWIO", "NHWC"))


def bottleneck_ref(x_nchw, p, stride):
    x = jnp.transpose(x_nchw, (0, 2, 3, 1)).astype(jnp.float32)

    def bn(y, g, b, m, v, eps=1e-5):
        return (y - m) / jnp.sqrt(v + eps) * g + b

    cin = x.shape[-1]
    cout = p["conv3_w"].shape[0]
    o = jax.nn.relu(bn(_conv_ref(x, p["conv1_w"], 1, 0),
                       p["bn1_g"], p["bn1_b"], p["bn1_m"], p["bn1_v"]))
    o = jax.nn.relu(bn(_conv_ref(o, p["conv2_w"], stride, 1),
                       p["bn2_g"], p["bn2_b"], p["bn2_m"], p["bn2_v"]))
    o = bn(_conv_ref(o, p["conv3_w"], 1, 0),
           p["bn3_g"], p["bn3_b"], p["bn3_m"], p["bn3_v"])
    if stride != 1 or cin != cout:
        ident = bn(_conv_ref(x, p["down_w"], stride, 0),
                   p["dbn_g"], p["dbn_b"], p["dbn_m"], p["dbn_v"])
    else:
        ident = x
    o = jax.nn.relu(o + ident)
    return jnp.transpose(o, (0, 3, 1, 2))


# ---------------------------------- main ------------------------------------


def make_params(cin, cb, cout, key):
    ks = jax.random.split(key, 4)

    def bn_params(c, shift):
        return (1.0 + 0.05 * jnp.arange(c, dtype=jnp.float32),
                0.01 * jnp.arange(c, dtype=jnp.float32) - shift,
                0.02 * jnp.arange(c, dtype=jnp.float32),
                1.0 + 0.03 * jnp.arange(c, dtype=jnp.float32))

    p = {}
    p["conv1_w"] = 0.2 * jax.random.normal(ks[0], (cb, cin, 1, 1), jnp.float32)
    p["conv2_w"] = 0.1 * jax.random.normal(ks[1], (cb, cb, 3, 3), jnp.float32)
    p["conv3_w"] = 0.2 * jax.random.normal(ks[2], (cout, cb, 1, 1), jnp.float32)
    p["down_w"] = 0.2 * jax.random.normal(ks[3], (cout, cin, 1, 1), jnp.float32)
    p["bn1_g"], p["bn1_b"], p["bn1_m"], p["bn1_v"] = bn_params(cb, 0.02)
    p["bn2_g"], p["bn2_b"], p["bn2_m"], p["bn2_v"] = bn_params(cb, 0.01)
    p["bn3_g"], p["bn3_b"], p["bn3_m"], p["bn3_v"] = bn_params(cout, 0.03)
    p["dbn_g"], p["dbn_b"], p["dbn_m"], p["dbn_v"] = bn_params(cout, 0.00)
    return p


def _run_case(key, n, cin, cb, cout, h, w, stride):
    kx, kp = jax.random.split(key)
    x = jax.random.normal(kx, (n, cin, h, w), jnp.float32)
    p = make_params(cin, cb, cout, kp)
    out = jax.block_until_ready(bottleneck_forward(x, p, stride))
    ref = jax.block_until_ready(bottleneck_ref(x, p, stride))
    # bf16 activations/weights vs f32 reference -> loosened tolerance.
    np.testing.assert_allclose(np.asarray(out), np.asarray(ref),
                               rtol=2e-2, atol=5e-2)
    ho = (h + 2 - 3) // stride + 1
    wo = (w + 2 - 3) // stride + 1
    assert out.shape == (n, cout, ho, wo)


if __name__ == "__main__":
    key = jax.random.PRNGKey(0)
    k1, k2 = jax.random.split(key)

    # Case 1: stride=2 with fused downsample branch (4 stride phases).
    _run_case(k1, n=2, cin=16, cb=16, cout=32, h=16, w=16, stride=2)

    # Case 2: stride=1 identity shortcut (single phase, Cin == Cout).
    _run_case(k2, n=2, cin=32, cb=8, cout=32, h=16, w=16, stride=1)

    print("KERNEL_OK")
</pallas_src>

<mosaic_0001>
module attributes {stable_mosaic.version = 11 : i64} {
  func.func @_mm_kernel(%arg0: i32, %arg1: memref<512x16xbf16, #tpu.memory_space<vmem>>, %arg2: memref<16x16xbf16, #tpu.memory_space<vmem>>, %arg3: memref<1x16xf32, #tpu.memory_space<vmem>>, %arg4: memref<512x16xf32, #tpu.memory_space<vmem>>) attributes {dimension_semantics = [#tpu.dimension_semantics<parallel>], iteration_bounds = array<i64: 1>, scalar_prefetch = 0 : i64, scratch_operands = 0 : i64, tpu.core_type = #tpu.core_type<tc>, window_params = [{transform_indices = @transform_0, window_bounds = array<i64: 512, 16>}, {pipeline_mode = #tpu.pipeline_mode<synchronous>, transform_indices = @transform_1, window_bounds = array<i64: 16, 16>}, {pipeline_mode = #tpu.pipeline_mode<synchronous>, transform_indices = @transform_2, window_bounds = array<i64: 1, 16>}, {transform_indices = @transform_3, window_bounds = array<i64: 512, 16>}]} {
    %c0 = arith.constant 0 : index
    %c0_0 = arith.constant 0 : index
    %0 = vector.load %arg1[%c0, %c0_0] : memref<512x16xbf16, #tpu.memory_space<vmem>>, vector<512x16xbf16>
    %c0_1 = arith.constant 0 : index
    %c0_2 = arith.constant 0 : index
    %1 = vector.load %arg2[%c0_1, %c0_2] : memref<16x16xbf16, #tpu.memory_space<vmem>>, vector<16x16xbf16>
    %cst = arith.constant dense<0.000000e+00> : vector<512x16xf32>
    %2 = tpu.matmul %0, %1, %cst {dimension_numbers = #tpu.dot_dimension_numbers<[1], [0], [0], [1], [0, 0, 1, 1], [], []>} : vector<512x16xbf16>, vector<16x16xbf16>, vector<512x16xf32> -> vector<512x16xf32>
    %c0_3 = arith.constant 0 : index
    %c0_4 = arith.constant 0 : index
    %3 = vector.load %arg3[%c0_3, %c0_4] : memref<1x16xf32, #tpu.memory_space<vmem>>, vector<1x16xf32>
    %4 = vector.broadcast %3 : vector<1x16xf32> to vector<512x16xf32>
    %5 = arith.addf %2, %4 : vector<512x16xf32>
    %cst_5 = arith.constant 0.000000e+00 : f32
    %6 = vector.broadcast %cst_5 : f32 to vector<512x16xf32>
    %7 = arith.maximumf %5, %6 : vector<512x16xf32>
    %c0_6 = arith.constant 0 : index
    %c0_7 = arith.constant 0 : index
    %8 = vector.load %arg4[%c0_6, %c0_7] : memref<512x16xf32, #tpu.memory_space<vmem>>, vector<512x16xf32>
    tpu.vector_store %arg4[%c0_6, %c0_7], %7 {strides = array<i32>} : memref<512x16xf32, #tpu.memory_space<vmem>>, vector<512x16xf32>,
    return
  }
  func.func @transform_0(%arg0: i32) -> (i32, i32) {
    %c0_i32 = arith.constant 0 : i32
    %c0_i32_0 = arith.constant 0 : i32
    return %arg0, %c0_i32 : i32, i32
  }
  func.func @transform_1(%arg0: i32) -> (i32, i32) {
    %c0_i32 = arith.constant 0 : i32
    %c0_i32_0 = arith.constant 0 : i32
    %c0_i32_1 = arith.constant 0 : i32
    return %c0_i32, %c0_i32_0 : i32, i32
  }
  func.func @transform_2(%arg0: i32) -> (i32, i32) {
    %c0_i32 = arith.constant 0 : i32
    %c0_i32_0 = arith.constant 0 : i32
    %c0_i32_1 = arith.constant 0 : i32
    return %c0_i32, %c0_i32_0 : i32, i32
  }
  func.func @transform_3(%arg0: i32) -> (i32, i32) {
    %c0_i32 = arith.constant 0 : i32
    %c0_i32_0 = arith.constant 0 : i32
    return %arg0, %c0_i32 : i32, i32
  }
}

</mosaic_0001>

<llo_original>
// kernel: tpu_custom_call.1
$region0: #{tpu_custom_call.1}
  #allocation0 [shape = 'u32[]', space=smem, size = 0x4, offset = 0x4, fixed_abs, tag = 'smem constant byte address 0x4 - core index']
  #allocation1 [shape = 'u32[144,128]{1,0:T(1,128)}', space=vmem, size = 0x12000, scoped, tag = 'internal scratch']
  %s0 = inlined_call_operand.vmem [shape: bf16[512,16], index: 0, kind: input, shape index: {}]
  %s1 = inlined_call_operand.vmem [shape: bf16[16,16], index: 1, kind: input, shape index: {}]
  %s2 = inlined_call_operand.vmem [shape: f32[1,16], index: 2, kind: input, shape index: {}]
  %s3 = inlined_call_operand.vmem [shape: f32[512,16], index: 3, kind: output, shape index: {}]
  %s4 = sld [smem:[#allocation0]]
  $region22: #{tpu_custom_call.1} parent=0
    _
  %s6 = ssub.s32 1, %s4
  %s7 = scalar_select 0, %s6, %s4
  // Predicated region
  $region2: #{tpu_custom_call.1} parent=0 // pred_check
    _
  $region3: #{tpu_custom_call.1} parent=0 // pred_check_branch
    %9 = sbr.rel (0) target = $region5
  $region4: #{tpu_custom_call.1} parent=0 // pred_region
    _
  $region5: #{tpu_custom_call.1} parent=0 // pred_fallthru
    _
  // Predicated region
  $region6: #{tpu_custom_call.1} parent=0 // pred_check
    _
  $region7: #{tpu_custom_call.1} parent=0 // pred_check_branch
    %11 = sbr.rel (0) target = $region9
  $region8: #{tpu_custom_call.1} parent=0 // pred_region
    _
  $region9: #{tpu_custom_call.1} parent=0 // pred_fallthru
    _
  // Predicated region
  $region10: #{tpu_custom_call.1} parent=0 // pred_check
    _
  $region11: #{tpu_custom_call.1} parent=0 // pred_check_branch
    %13 = sbr.rel (0) target = $region13
  $region12: #{tpu_custom_call.1} parent=0 // pred_region
    _
  $region13: #{tpu_custom_call.1} parent=0 // pred_fallthru
    _
  %v15 = vld [vmem:[%s0] sm:$0xf]
  %v16 = vld [vmem:[%s0 + $0x4] sm:$0xf]
  %v17 = vld [vmem:[%s0 + $0x8] sm:$0xf]
  %v18 = vld [vmem:[%s0 + $0xc] sm:$0xf]
  %v19 = vld [vmem:[%s0 + $0x10] sm:$0xf]
  %v20 = vld [vmem:[%s0 + $0x14] sm:$0xf]
  %v21 = vld [vmem:[%s0 + $0x18] sm:$0xf]
  %v22 = vld [vmem:[%s0 + $0x1c] sm:$0xf]
  %v23 = vld [vmem:[%s0 + $0x20] sm:$0xf]
  %v24 = vld [vmem:[%s0 + $0x24] sm:$0xf]
  %v25 = vld [vmem:[%s0 + $0x28] sm:$0xf]
  %v26 = vld [vmem:[%s0 + $0x2c] sm:$0xf]
  %v27 = vld [vmem:[%s0 + $0x30] sm:$0xf]
  %v28 = vld [vmem:[%s0 + $0x34] sm:$0xf]
  %v29 = vld [vmem:[%s0 + $0x38] sm:$0xf]
  %v30 = vld [vmem:[%s0 + $0x3c] sm:$0xf]
  %v31 = vld [vmem:[%s0 + $0x40] sm:$0xf]
  %v32 = vld [vmem:[%s0 + $0x44] sm:$0xf]
  %v33 = vld [vmem:[%s0 + $0x48] sm:$0xf]
  %v34 = vld [vmem:[%s0 + $0x4c] sm:$0xf]
  %v35 = vld [vmem:[%s0 + $0x50] sm:$0xf]
  %v36 = vld [vmem:[%s0 + $0x54] sm:$0xf]
  %v37 = vld [vmem:[%s0 + $0x58] sm:$0xf]
  %v38 = vld [vmem:[%s0 + $0x5c] sm:$0xf]
  %v39 = vld [vmem:[%s0 + $0x60] sm:$0xf]
  %v40 = vld [vmem:[%s0 + $0x64] sm:$0xf]
  %v41 = vld [vmem:[%s0 + $0x68] sm:$0xf]
  %v42 = vld [vmem:[%s0 + $0x6c] sm:$0xf]
  %v43 = vld [vmem:[%s0 + $0x70] sm:$0xf]
  %v44 = vld [vmem:[%s0 + $0x74] sm:$0xf]
  %v45 = vld [vmem:[%s0 + $0x78] sm:$0xf]
  %v46 = vld [vmem:[%s0 + $0x7c] sm:$0xf]
  %v47 = vld [vmem:[%s0 + $0x80] sm:$0xf]
  %v48 = vld [vmem:[%s0 + $0x84] sm:$0xf]
  %v49 = vld [vmem:[%s0 + $0x88] sm:$0xf]
  %v50 = vld [vmem:[%s0 + $0x8c] sm:$0xf]
  %v51 = vld [vmem:[%s0 + $0x90] sm:$0xf]
  %v52 = vld [vmem:[%s0 + $0x94] sm:$0xf]
  %v53 = vld [vmem:[%s0 + $0x98] sm:$0xf]
  %v54 = vld [vmem:[%s0 + $0x9c] sm:$0xf]
  %v55 = vld [vmem:[%s0 + $0xa0] sm:$0xf]
  %v56 = vld [vmem:[%s0 + $0xa4] sm:$0xf]
  %v57 = vld [vmem:[%s0 + $0xa8] sm:$0xf]
  %v58 = vld [vmem:[%s0 + $0xac] sm:$0xf]
  %v59 = vld [vmem:[%s0 + $0xb0] sm:$0xf]
  %v60 = vld [vmem:[%s0 + $0xb4] sm:$0xf]
  %v61 = vld [vmem:[%s0 + $0xb8] sm:$0xf]
  %v62 = vld [vmem:[%s0 + $0xbc] sm:$0xf]
  %v63 = vld [vmem:[%s0 + $0xc0] sm:$0xf]
  %v64 = vld [vmem:[%s0 + $0xc4] sm:$0xf]
  %v65 = vld [vmem:[%s0 + $0xc8] sm:$0xf]
  %v66 = vld [vmem:[%s0 + $0xcc] sm:$0xf]
  %v67 = vld [vmem:[%s0 + $0xd0] sm:$0xf]
  %v68 = vld [vmem:[%s0 + $0xd4] sm:$0xf]
  %v69 = vld [vmem:[%s0 + $0xd8] sm:$0xf]
  %v70 = vld [vmem:[%s0 + $0xdc] sm:$0xf]
  %v71 = vld [vmem:[%s0 + $0xe0] sm:$0xf]
  %v72 = vld [vmem:[%s0 + $0xe4] sm:$0xf]
  %v73 = vld [vmem:[%s0 + $0xe8] sm:$0xf]
  %v74 = vld [vmem:[%s0 + $0xec] sm:$0xf]
  %v75 = vld [vmem:[%s0 + $0xf0] sm:$0xf]
  %v76 = vld [vmem:[%s0 + $0xf4] sm:$0xf]
  %v77 = vld [vmem:[%s0 + $0xf8] sm:$0xf]
  %v78 = vld [vmem:[%s0 + $0xfc] sm:$0xf]
  %v79 = vld [vmem:[%s1] sm:$0xf]
  %v80 = vld [vmem:[%s1 + $0x4] sm:$0xf]
  %v81 = vld [vmem:[%s2] sm:$0x1]
  %v83 = vlaneseq
  %v84 = vshrl.u32 %v83, 7
  %v85 = vsub.s32 0, %v84
  %v86 = vrot.slane %v81, %v85
  %v152 = vunpack.c.l.b16 %v15
  %v153 = vunpack.c.l.b16 %v16
  %v154 = vunpack.c.l.b16 %v17
  %v155 = vunpack.c.l.b16 %v18
  %v156 = vunpack.c.l.b16 %v19
  %v157 = vunpack.c.l.b16 %v20
  %v158 = vunpack.c.l.b16 %v21
  %v159 = vunpack.c.l.b16 %v22
  %v160 = vunpack.c.l.b16 %v23
  %v161 = vunpack.c.l.b16 %v24
  %v162 = vunpack.c.l.b16 %v25
  %v163 = vunpack.c.l.b16 %v26
  %v164 = vunpack.c.l.b16 %v27
  %v165 = vunpack.c.l.b16 %v28
  %v166 = vunpack.c.l.b16 %v29
  %v167 = vunpack.c.l.b16 %v30
  %v168 = vunpack.c.l.b16 %v31
  %v169 = vunpack.c.l.b16 %v32
  %v170 = vunpack.c.l.b16 %v33
  %v171 = vunpack.c.l.b16 %v34
  %v172 = vunpack.c.l.b16 %v35
  %v173 = vunpack.c.l.b16 %v36
  %v174 = vunpack.c.l.b16 %v37
  %v175 = vunpack.c.l.b16 %v38
  %v176 = vunpack.c.l.b16 %v39
  %v177 = vunpack.c.l.b16 %v40
  %v178 = vunpack.c.l.b16 %v41
  %v179 = vunpack.c.l.b16 %v42
  %v180 = vunpack.c.l.b16 %v43
  %v181 = vunpack.c.l.b16 %v44
  %v182 = vunpack.c.l.b16 %v45
  %v183 = vunpack.c.l.b16 %v46
  %v184 = vunpack.c.l.b16 %v47
  %v185 = vunpack.c.l.b16 %v48
  %v186 = vunpack.c.l.b16 %v49
  %v187 = vunpack.c.l.b16 %v50
  %v188 = vunpack.c.l.b16 %v51
  %v189 = vunpack.c.l.b16 %v52
  %v190 = vunpack.c.l.b16 %v53
  %v191 = vunpack.c.l.b16 %v54
  %v192 = vunpack.c.l.b16 %v55
  %v193 = vunpack.c.l.b16 %v56
  %v194 = vunpack.c.l.b16 %v57
  %v195 = vunpack.c.l.b16 %v58
  %v196 = vunpack.c.l.b16 %v59
  %v197 = vunpack.c.l.b16 %v60
  %v198 = vunpack.c.l.b16 %v61
  %v199 = vunpack.c.l.b16 %v62
  %v200 = vunpack.c.l.b16 %v63
  %v201 = vunpack.c.l.b16 %v64
  %v202 = vunpack.c.l.b16 %v65
  %v203 = vunpack.c.l.b16 %v66
  %v204 = vunpack.c.l.b16 %v67
  %v205 = vunpack.c.l.b16 %v68
  %v206 = vunpack.c.l.b16 %v69
  %v207 = vunpack.c.l.b16 %v70
  %v208 = vunpack.c.l.b16 %v71
  %v209 = vunpack.c.l.b16 %v72
  %v210 = vunpack.c.l.b16 %v73
  %v211 = vunpack.c.l.b16 %v74
  %v212 = vunpack.c.l.b16 %v75
  %v213 = vunpack.c.l.b16 %v76
  %v214 = vunpack.c.l.b16 %v77
  %v215 = vunpack.c.l.b16 %v78
  %v216 = vpack.c.b16 %v153, %v152
  %v217 = vpack.c.b16 %v155, %v154
  %v218 = vpack.c.b16 %v157, %v156
  %v219 = vpack.c.b16 %v159, %v158
  %v220 = vpack.c.b16 %v161, %v160
  %v221 = vpack.c.b16 %v163, %v162
  %v222 = vpack.c.b16 %v165, %v164
  %v223 = vpack.c.b16 %v167, %v166
  %v224 = vpack.c.b16 %v169, %v168
  %v225 = vpack.c.b16 %v171, %v170
  %v226 = vpack.c.b16 %v173, %v172
  %v227 = vpack.c.b16 %v175, %v174
  %v228 = vpack.c.b16 %v177, %v176
  %v229 = vpack.c.b16 %v179, %v178
  %v230 = vpack.c.b16 %v181, %v180
  %v231 = vpack.c.b16 %v183, %v182
  %v232 = vpack.c.b16 %v185, %v184
  %v233 = vpack.c.b16 %v187, %v186
  %v234 = vpack.c.b16 %v189, %v188
  %v235 = vpack.c.b16 %v191, %v190
  %v236 = vpack.c.b16 %v193, %v192
  %v237 = vpack.c.b16 %v195, %v194
  %v238 = vpack.c.b16 %v197, %v196
  %v239 = vpack.c.b16 %v199, %v198
  %v240 = vpack.c.b16 %v201, %v200
  %v241 = vpack.c.b16 %v203, %v202
  %v242 = vpack.c.b16 %v205, %v204
  %v243 = vpack.c.b16 %v207, %v206
  %v244 = vpack.c.b16 %v209, %v208
  %v245 = vpack.c.b16 %v211, %v210
  %v246 = vpack.c.b16 %v213, %v212
  %v247 = vpack.c.b16 %v215, %v214
  %v250 = vunpack.c.l.b16 %v79
  %v251 = vunpack.c.l.b16 %v80
  %v252 = vpack.c.b16 %v251, %v250
  %vm254 = vcmask 130048
  %v256 = vsel %vm254, %v216, 0
  %v259 = vsel %vm254, %v217, 0
  %v262 = vsel %vm254, %v218, 0
  %v265 = vsel %vm254, %v219, 0
  %v268 = vsel %vm254, %v220, 0
  %v271 = vsel %vm254, %v221, 0
  %v274 = vsel %vm254, %v222, 0
  %v277 = vsel %vm254, %v223, 0
  %v280 = vsel %vm254, %v224, 0
  %v283 = vsel %vm254, %v225, 0
  %v286 = vsel %vm254, %v226, 0
  %v289 = vsel %vm254, %v227, 0
  %v292 = vsel %vm254, %v228, 0
  %v295 = vsel %vm254, %v229, 0
  %v298 = vsel %vm254, %v230, 0
  %v301 = vsel %vm254, %v231, 0
  %v304 = vsel %vm254, %v232, 0
  %v307 = vsel %vm254, %v233, 0
  %v310 = vsel %vm254, %v234, 0
  %v313 = vsel %vm254, %v235, 0
  %v316 = vsel %vm254, %v236, 0
  %v319 = vsel %vm254, %v237, 0
  %v322 = vsel %vm254, %v238, 0
  %v325 = vsel %vm254, %v239, 0
  %v328 = vsel %vm254, %v240, 0
  %v331 = vsel %vm254, %v241, 0
  %v334 = vsel %vm254, %v242, 0
  %v337 = vsel %vm254, %v243, 0
  %v340 = vsel %vm254, %v244, 0
  %v343 = vsel %vm254, %v245, 0
  %v346 = vsel %vm254, %v246, 0
  %v349 = vsel %vm254, %v247, 0
  %351 = vmatprep.subr.bf16.mxu0 0
  %352 = vmatpush1.bf16.msra.mxu0 0
  %353 = vmatprep.subr.bf16.mxu0 0
  %354 = vmatpush1.bf16.msra.mxu0 0
  %355 = vmatprep.subr.bf16.mxu0 0
  %356 = vmatpush1.bf16.msra.mxu0 0
  %357 = vmatprep.subr.bf16.mxu0 0
  %358 = vmatpush1.bf16.msra.mxu0 0
  %359 = vmatprep.subr.bf16.mxu0 0
  %360 = vmatpush1.bf16.msra.mxu0 0
  %361 = vmatprep.subr.bf16.mxu0 0
  %362 = vmatpush1.bf16.msra.mxu0 0
  %363 = vmatprep.subr.bf16.mxu0 0
  %364 = vmatpush1.bf16.msra.mxu0 0
  %365 = vmatprep.subr.bf16.mxu0 0
  %366 = vmatpush1.bf16.msra.mxu0 %v252
  %367 = vmatprep.subr.bf16.mxu0 0
  %368 = vmatpush2.bf16.msra.mxu0 0
  %369 = vmatprep.subr.bf16.mxu0 0
  %370 = vmatpush2.bf16.msra.mxu0 0
  %371 = vmatprep.subr.bf16.mxu0 0
  %372 = vmatpush2.bf16.msra.mxu0 0
  %373 = vmatprep.subr.bf16.mxu0 0
  %374 = vmatpush2.bf16.msra.mxu0 0
  %375 = vmatprep.subr.bf16.mxu0 0
  %376 = vmatpush2.bf16.msra.mxu0 0
  %377 = vmatprep.subr.bf16.mxu0 0
  %378 = vmatpush2.bf16.msra.mxu0 0
  %379 = vmatprep.subr.bf16.mxu0 0
  %380 = vmatpush2.bf16.msra.mxu0 0
  %381 = vmatprep.subr.bf16.mxu0 0
  %382 = vmatpush2.bf16.msra.mxu0 0
  %383 = vmatprep.mubr.bf16.mxu0 0
  %384 = vmatmul.mubr.bf16.gmra.mxu0 %v256
  %v385 = vpop.f32.mrf.mxu0
  %v386 = vadd.f32 %v86, %v385
  %v387 = vpop.f32.mrf.mxu0
  %v388 = vpop.f32.mrf.mxu0
  %v389 = vadd.f32 %v86, %v388
  %v390 = vpop.f32.mrf.mxu0
  %391 = vmatprep.mubr.bf16.mxu0 0
  %392 = vmatmul.mubr.bf16.gmra.mxu0 %v259
  %v393 = vpop.f32.mrf.mxu0
  %v394 = vadd.f32 %v86, %v393
  %v395 = vpop.f32.mrf.mxu0
  %v396 = vpop.f32.mrf.mxu0
  %v397 = vadd.f32 %v86, %v396
  %v398 = vpop.f32.mrf.mxu0
  %399 = vmatprep.mubr.bf16.mxu0 0
  %400 = vmatmul.mubr.bf16.gmra.mxu0 %v262
  %v401 = vpop.f32.mrf.mxu0
  %v402 = vadd.f32 %v86, %v401
  %v403 = vpop.f32.mrf.mxu0
  %v404 = vpop.f32.mrf.mxu0
  %v405 = vadd.f32 %v86, %v404
  %v406 = vpop.f32.mrf.mxu0
  %407 = vmatprep.mubr.bf16.mxu0 0
  %408 = vmatmul.mubr.bf16.gmra.mxu0 %v265
  %v409 = vpop.f32.mrf.mxu0
  %v410 = vadd.f32 %v86, %v409
  %v411 = vpop.f32.mrf.mxu0
  %v412 = vpop.f32.mrf.mxu0
  %v413 = vadd.f32 %v86, %v412
  %v414 = vpop.f32.mrf.mxu0
  %415 = vmatprep.mubr.bf16.mxu0 0
  %416 = vmatmul.mubr.bf16.gmra.mxu0 %v268
  %v417 = vpop.f32.mrf.mxu0
  %v418 = vadd.f32 %v86, %v417
  %v419 = vpop.f32.mrf.mxu0
  %v420 = vpop.f32.mrf.mxu0
  %v421 = vadd.f32 %v86, %v420
  %v422 = vpop.f32.mrf.mxu0
  %423 = vmatprep.mubr.bf16.mxu0 0
  %424 = vmatmul.mubr.bf16.gmra.mxu0 %v271
  %v425 = vpop.f32.mrf.mxu0
  %v426 = vadd.f32 %v86, %v425
  %v427 = vpop.f32.mrf.mxu0
  %v428 = vpop.f32.mrf.mxu0
  %v429 = vadd.f32 %v86, %v428
  %v430 = vpop.f32.mrf.mxu0
  %431 = vmatprep.mubr.bf16.mxu0 0
  %432 = vmatmul.mubr.bf16.gmra.mxu0 %v274
  %v433 = vpop.f32.mrf.mxu0
  %v434 = vadd.f32 %v86, %v433
  %v435 = vpop.f32.mrf.mxu0
  %v436 = vpop.f32.mrf.mxu0
  %v437 = vadd.f32 %v86, %v436
  %v438 = vpop.f32.mrf.mxu0
  %439 = vmatprep.mubr.bf16.mxu0 0
  %440 = vmatmul.mubr.bf16.gmra.mxu0 %v277
  %v441 = vpop.f32.mrf.mxu0
  %v442 = vadd.f32 %v86, %v441
  %v443 = vpop.f32.mrf.mxu0
  %v444 = vpop.f32.mrf.mxu0
  %v445 = vadd.f32 %v86, %v444
  %v446 = vpop.f32.mrf.mxu0
  %447 = vmatprep.mubr.bf16.mxu0 0
  %448 = vmatmul.mubr.bf16.gmra.mxu0 %v280
  %v449 = vpop.f32.mrf.mxu0
  %v450 = vadd.f32 %v86, %v449
  %v451 = vpop.f32.mrf.mxu0
  %v452 = vpop.f32.mrf.mxu0
  %v453 = vadd.f32 %v86, %v452
  %v454 = vpop.f32.mrf.mxu0
  %455 = vmatprep.mubr.bf16.mxu0 0
  %456 = vmatmul.mubr.bf16.gmra.mxu0 %v283
  %v457 = vpop.f32.mrf.mxu0
  %v458 = vadd.f32 %v86, %v457
  %v459 = vpop.f32.mrf.mxu0
  %v460 = vpop.f32.mrf.mxu0
  %v461 = vadd.f32 %v86, %v460
  %v462 = vpop.f32.mrf.mxu0
  %463 = vmatprep.mubr.bf16.mxu0 0
  %464 = vmatmul.mubr.bf16.gmra.mxu0 %v286
  %v465 = vpop.f32.mrf.mxu0
  %v466 = vadd.f32 %v86, %v465
  %v467 = vpop.f32.mrf.mxu0
  %v468 = vpop.f32.mrf.mxu0
  %v469 = vadd.f32 %v86, %v468
  %v470 = vpop.f32.mrf.mxu0
  %471 = vmatprep.mubr.bf16.mxu0 0
  %472 = vmatmul.mubr.bf16.gmra.mxu0 %v289
  %v473 = vpop.f32.mrf.mxu0
  %v474 = vadd.f32 %v86, %v473
  %v475 = vpop.f32.mrf.mxu0
  %v476 = vpop.f32.mrf.mxu0
  %v477 = vadd.f32 %v86, %v476
  %v478 = vpop.f32.mrf.mxu0
  %479 = vmatprep.mubr.bf16.mxu0 0
  %480 = vmatmul.mubr.bf16.gmra.mxu0 %v292
  %v481 = vpop.f32.mrf.mxu0
  %v482 = vadd.f32 %v86, %v481
  %v483 = vpop.f32.mrf.mxu0
  %v484 = vpop.f32.mrf.mxu0
  %v485 = vadd.f32 %v86, %v484
  %v486 = vpop.f32.mrf.mxu0
  %487 = vmatprep.mubr.bf16.mxu0 0
  %488 = vmatmul.mubr.bf16.gmra.mxu0 %v295
  %v489 = vpop.f32.mrf.mxu0
  %v490 = vadd.f32 %v86, %v489
  %v491 = vpop.f32.mrf.mxu0
  %v492 = vpop.f32.mrf.mxu0
  %v493 = vadd.f32 %v86, %v492
  %v494 = vpop.f32.mrf.mxu0
  %495 = vmatprep.mubr.bf16.mxu0 0
  %496 = vmatmul.mubr.bf16.gmra.mxu0 %v298
  %v497 = vpop.f32.mrf.mxu0
  %v498 = vadd.f32 %v86, %v497
  %v499 = vpop.f32.mrf.mxu0
  %v500 = vpop.f32.mrf.mxu0
  %v501 = vadd.f32 %v86, %v500
  %v502 = vpop.f32.mrf.mxu0
  %503 = vmatprep.mubr.bf16.mxu0 0
  %504 = vmatmul.mubr.bf16.gmra.mxu0 %v301
  %v505 = vpop.f32.mrf.mxu0
  %v506 = vadd.f32 %v86, %v505
  %v507 = vpop.f32.mrf.mxu0
  %v508 = vpop.f32.mrf.mxu0
  %v509 = vadd.f32 %v86, %v508
  %v510 = vpop.f32.mrf.mxu0
  %511 = vmatprep.mubr.bf16.mxu0 0
  %512 = vmatmul.mubr.bf16.gmra.mxu0 %v304
  %v513 = vpop.f32.mrf.mxu0
  %v514 = vadd.f32 %v86, %v513
  %v515 = vpop.f32.mrf.mxu0
  %v516 = vpop.f32.mrf.mxu0
  %v517 = vadd.f32 %v86, %v516
  %v518 = vpop.f32.mrf.mxu0
  %519 = vmatprep.mubr.bf16.mxu0 0
  %520 = vmatmul.mubr.bf16.gmra.mxu0 %v307
  %v521 = vpop.f32.mrf.mxu0
  %v522 = vadd.f32 %v86, %v521
  %v523 = vpop.f32.mrf.mxu0
  %v524 = vpop.f32.mrf.mxu0
  %v525 = vadd.f32 %v86, %v524
  %v526 = vpop.f32.mrf.mxu0
  %527 = vmatprep.mubr.bf16.mxu0 0
  %528 = vmatmul.mubr.bf16.gmra.mxu0 %v310
  %v529 = vpop.f32.mrf.mxu0
  %v530 = vadd.f32 %v86, %v529
  %v531 = vpop.f32.mrf.mxu0
  %v532 = vpop.f32.mrf.mxu0
  %v533 = vadd.f32 %v86, %v532
  %v534 = vpop.f32.mrf.mxu0
  %535 = vmatprep.mubr.bf16.mxu0 0
  %536 = vmatmul.mubr.bf16.gmra.mxu0 %v313
  %v537 = vpop.f32.mrf.mxu0
  %v538 = vadd.f32 %v86, %v537
  %v539 = vpop.f32.mrf.mxu0
  %v540 = vpop.f32.mrf.mxu0
  %v541 = vadd.f32 %v86, %v540
  %v542 = vpop.f32.mrf.mxu0
  %543 = vmatprep.mubr.bf16.mxu0 0
  %544 = vmatmul.mubr.bf16.gmra.mxu0 %v316
  %v545 = vpop.f32.mrf.mxu0
  %v546 = vadd.f32 %v86, %v545
  %v547 = vpop.f32.mrf.mxu0
  %v548 = vpop.f32.mrf.mxu0
  %v549 = vadd.f32 %v86, %v548
  %v550 = vpop.f32.mrf.mxu0
  %551 = vmatprep.mubr.bf16.mxu0 0
  %552 = vmatmul.mubr.bf16.gmra.mxu0 %v319
  %v553 = vpop.f32.mrf.mxu0
  %v554 = vadd.f32 %v86, %v553
  %v555 = vpop.f32.mrf.mxu0
  %v556 = vpop.f32.mrf.mxu0
  %v557 = vadd.f32 %v86, %v556
  %v558 = vpop.f32.mrf.mxu0
  %559 = vmatprep.mubr.bf16.mxu0 0
  %560 = vmatmul.mubr.bf16.gmra.mxu0 %v322
  %v561 = vpop.f32.mrf.mxu0
  %v562 = vadd.f32 %v86, %v561
  %v563 = vpop.f32.mrf.mxu0
  %v564 = vpop.f32.mrf.mxu0
  %v565 = vadd.f32 %v86, %v564
  %v566 = vpop.f32.mrf.mxu0
  %567 = vmatprep.mubr.bf16.mxu0 0
  %568 = vmatmul.mubr.bf16.gmra.mxu0 %v325
  %v569 = vpop.f32.mrf.mxu0
  %v570 = vadd.f32 %v86, %v569
  %v571 = vpop.f32.mrf.mxu0
  %v572 = vpop.f32.mrf.mxu0
  %v573 = vadd.f32 %v86, %v572
  %v574 = vpop.f32.mrf.mxu0
  %575 = vmatprep.mubr.bf16.mxu0 0
  %576 = vmatmul.mubr.bf16.gmra.mxu0 %v328
  %v577 = vpop.f32.mrf.mxu0
  %v578 = vadd.f32 %v86, %v577
  %v579 = vpop.f32.mrf.mxu0
  %v580 = vpop.f32.mrf.mxu0
  %v581 = vadd.f32 %v86, %v580
  %v582 = vpop.f32.mrf.mxu0
  %583 = vmatprep.mubr.bf16.mxu0 0
  %584 = vmatmul.mubr.bf16.gmra.mxu0 %v331
  %v585 = vpop.f32.mrf.mxu0
  %v586 = vadd.f32 %v86, %v585
  %v587 = vpop.f32.mrf.mxu0
  %v588 = vpop.f32.mrf.mxu0
  %v589 = vadd.f32 %v86, %v588
  %v590 = vpop.f32.mrf.mxu0
  %591 = vmatprep.mubr.bf16.mxu0 0
  %592 = vmatmul.mubr.bf16.gmra.mxu0 %v334
  %v593 = vpop.f32.mrf.mxu0
  %v594 = vadd.f32 %v86, %v593
  %v595 = vpop.f32.mrf.mxu0
  %v596 = vpop.f32.mrf.mxu0
  %v597 = vadd.f32 %v86, %v596
  %v598 = vpop.f32.mrf.mxu0
  %599 = vmatprep.mubr.bf16.mxu0 0
  %600 = vmatmul.mubr.bf16.gmra.mxu0 %v337
  %v601 = vpop.f32.mrf.mxu0
  %v602 = vadd.f32 %v86, %v601
  %v603 = vpop.f32.mrf.mxu0
  %v604 = vpop.f32.mrf.mxu0
  %v605 = vadd.f32 %v86, %v604
  %v606 = vpop.f32.mrf.mxu0
  %607 = vmatprep.mubr.bf16.mxu0 0
  %608 = vmatmul.mubr.bf16.gmra.mxu0 %v340
  %v609 = vpop.f32.mrf.mxu0
  %v610 = vadd.f32 %v86, %v609
  %v611 = vpop.f32.mrf.mxu0
  %v612 = vpop.f32.mrf.mxu0
  %v613 = vadd.f32 %v86, %v612
  %v614 = vpop.f32.mrf.mxu0
  %615 = vmatprep.mubr.bf16.mxu0 0
  %616 = vmatmul.mubr.bf16.gmra.mxu0 %v343
  %v617 = vpop.f32.mrf.mxu0
  %v618 = vadd.f32 %v86, %v617
  %v619 = vpop.f32.mrf.mxu0
  %v620 = vpop.f32.mrf.mxu0
  %v621 = vadd.f32 %v86, %v620
  %v622 = vpop.f32.mrf.mxu0
  %623 = vmatprep.mubr.bf16.mxu0 0
  %624 = vmatmul.mubr.bf16.gmra.mxu0 %v346
  %v625 = vpop.f32.mrf.mxu0
  %v626 = vadd.f32 %v86, %v625
  %v627 = vpop.f32.mrf.mxu0
  %v628 = vpop.f32.mrf.mxu0
  %v629 = vadd.f32 %v86, %v628
  %v630 = vpop.f32.mrf.mxu0
  %631 = vmatprep.mubr.bf16.mxu0 0
  %632 = vmatmul.mubr.bf16.gmra.mxu0 %v349
  %v633 = vpop.f32.mrf.mxu0
  %v634 = vadd.f32 %v86, %v633
  %v635 = vpop.f32.mrf.mxu0
  %v636 = vpop.f32.mrf.mxu0
  %v637 = vadd.f32 %v86, %v636
  %v638 = vpop.f32.mrf.mxu0
  %639 = vdwg.mxu0
  %v640 = vmax.f32 %v386, 0.0
  %v641 = vmax.f32 %v389, 0.0
  %v642 = vmax.f32 %v394, 0.0
  %v643 = vmax.f32 %v397, 0.0
  %v644 = vmax.f32 %v402, 0.0
  %v645 = vmax.f32 %v405, 0.0
  %v646 = vmax.f32 %v410, 0.0
  %v647 = vmax.f32 %v413, 0.0
  %v648 = vmax.f32 %v418, 0.0
  %v649 = vmax.f32 %v421, 0.0
  %v650 = vmax.f32 %v426, 0.0
  %v651 = vmax.f32 %v429, 0.0
  %v652 = vmax.f32 %v434, 0.0
  %v653 = vmax.f32 %v437, 0.0
  %v654 = vmax.f32 %v442, 0.0
  %v655 = vmax.f32 %v445, 0.0
  %v656 = vmax.f32 %v450, 0.0
  %v657 = vmax.f32 %v453, 0.0
  %v658 = vmax.f32 %v458, 0.0
  %v659 = vmax.f32 %v461, 0.0
  %v660 = vmax.f32 %v466, 0.0
  %v661 = vmax.f32 %v469, 0.0
  %v662 = vmax.f32 %v474, 0.0
  %v663 = vmax.f32 %v477, 0.0
  %v664 = vmax.f32 %v482, 0.0
  %v665 = vmax.f32 %v485, 0.0
  %v666 = vmax.f32 %v490, 0.0
  %v667 = vmax.f32 %v493, 0.0
  %v668 = vmax.f32 %v498, 0.0
  %v669 = vmax.f32 %v501, 0.0
  %v670 = vmax.f32 %v506, 0.0
  %v671 = vmax.f32 %v509, 0.0
  %v672 = vmax.f32 %v514, 0.0
  %v673 = vmax.f32 %v517, 0.0
  %v674 = vmax.f32 %v522, 0.0
  %v675 = vmax.f32 %v525, 0.0
  %v676 = vmax.f32 %v530, 0.0
  %v677 = vmax.f32 %v533, 0.0
  %v678 = vmax.f32 %v538, 0.0
  %v679 = vmax.f32 %v541, 0.0
  %v680 = vmax.f32 %v546, 0.0
  %v681 = vmax.f32 %v549, 0.0
  %v682 = vmax.f32 %v554, 0.0
  %v683 = vmax.f32 %v557, 0.0
  %v684 = vmax.f32 %v562, 0.0
  %v685 = vmax.f32 %v565, 0.0
  %v686 = vmax.f32 %v570, 0.0
  %v687 = vmax.f32 %v573, 0.0
  %v688 = vmax.f32 %v578, 0.0
  %v689 = vmax.f32 %v581, 0.0
  %v690 = vmax.f32 %v586, 0.0
  %v691 = vmax.f32 %v589, 0.0
  %v692 = vmax.f32 %v594, 0.0
  %v693 = vmax.f32 %v597, 0.0
  %v694 = vmax.f32 %v602, 0.0
  %v695 = vmax.f32 %v605, 0.0
  %v696 = vmax.f32 %v610, 0.0
  %v697 = vmax.f32 %v613, 0.0
  %v698 = vmax.f32 %v618, 0.0
  %v699 = vmax.f32 %v621, 0.0
  %v700 = vmax.f32 %v626, 0.0
  %v701 = vmax.f32 %v629, 0.0
  %v702 = vmax.f32 %v634, 0.0
  %v703 = vmax.f32 %v637, 0.0
  %704 = vst.msk [vmem:[%s3] sm:$0xff] %vm254, %v640
  %705 = vst.msk [vmem:[%s3 + $0x8] sm:$0xff] %vm254, %v641
  %706 = vst.msk [vmem:[%s3 + $0x10] sm:$0xff] %vm254, %v642
  %707 = vst.msk [vmem:[%s3 + $0x18] sm:$0xff] %vm254, %v643
  %708 = vst.msk [vmem:[%s3 + $0x20] sm:$0xff] %vm254, %v644
  %709 = vst.msk [vmem:[%s3 + $0x28] sm:$0xff] %vm254, %v645
  %710 = vst.msk [vmem:[%s3 + $0x30] sm:$0xff] %vm254, %v646
  %711 = vst.msk [vmem:[%s3 + $0x38] sm:$0xff] %vm254, %v647
  %712 = vst.msk [vmem:[%s3 + $0x40] sm:$0xff] %vm254, %v648
  %713 = vst.msk [vmem:[%s3 + $0x48] sm:$0xff] %vm254, %v649
  %714 = vst.msk [vmem:[%s3 + $0x50] sm:$0xff] %vm254, %v650
  %715 = vst.msk [vmem:[%s3 + $0x58] sm:$0xff] %vm254, %v651
  %716 = vst.msk [vmem:[%s3 + $0x60] sm:$0xff] %vm254, %v652
  %717 = vst.msk [vmem:[%s3 + $0x68] sm:$0xff] %vm254, %v653
  %718 = vst.msk [vmem:[%s3 + $0x70] sm:$0xff] %vm254, %v654
  %719 = vst.msk [vmem:[%s3 + $0x78] sm:$0xff] %vm254, %v655
  %720 = vst.msk [vmem:[%s3 + $0x80] sm:$0xff] %vm254, %v656
  %721 = vst.msk [vmem:[%s3 + $0x88] sm:$0xff] %vm254, %v657
  %722 = vst.msk [vmem:[%s3 + $0x90] sm:$0xff] %vm254, %v658
  %723 = vst.msk [vmem:[%s3 + $0x98] sm:$0xff] %vm254, %v659
  %724 = vst.msk [vmem:[%s3 + $0xa0] sm:$0xff] %vm254, %v660
  %725 = vst.msk [vmem:[%s3 + $0xa8] sm:$0xff] %vm254, %v661
  %726 = vst.msk [vmem:[%s3 + $0xb0] sm:$0xff] %vm254, %v662
  %727 = vst.msk [vmem:[%s3 + $0xb8] sm:$0xff] %vm254, %v663
  %728 = vst.msk [vmem:[%s3 + $0xc0] sm:$0xff] %vm254, %v664
  %729 = vst.msk [vmem:[%s3 + $0xc8] sm:$0xff] %vm254, %v665
  %730 = vst.msk [vmem:[%s3 + $0xd0] sm:$0xff] %vm254, %v666
  %731 = vst.msk [vmem:[%s3 + $0xd8] sm:$0xff] %vm254, %v667
  %732 = vst.msk [vmem:[%s3 + $0xe0] sm:$0xff] %vm254, %v668
  %733 = vst.msk [vmem:[%s3 + $0xe8] sm:$0xff] %vm254, %v669
  %734 = vst.msk [vmem:[%s3 + $0xf0] sm:$0xff] %vm254, %v670
  %735 = vst.msk [vmem:[%s3 + $0xf8] sm:$0xff] %vm254, %v671
  %736 = vst.msk [vmem:[%s3 + $0x100] sm:$0xff] %vm254, %v672
  %737 = vst.msk [vmem:[%s3 + $0x108] sm:$0xff] %vm254, %v673
  %738 = vst.msk [vmem:[%s3 + $0x110] sm:$0xff] %vm254, %v674
  %739 = vst.msk [vmem:[%s3 + $0x118] sm:$0xff] %vm254, %v675
  %740 = vst.msk [vmem:[%s3 + $0x120] sm:$0xff] %vm254, %v676
  %741 = vst.msk [vmem:[%s3 + $0x128] sm:$0xff] %vm254, %v677
  %742 = vst.msk [vmem:[%s3 + $0x130] sm:$0xff] %vm254, %v678
  %743 = vst.msk [vmem:[%s3 + $0x138] sm:$0xff] %vm254, %v679
  %744 = vst.msk [vmem:[%s3 + $0x140] sm:$0xff] %vm254, %v680
  %745 = vst.msk [vmem:[%s3 + $0x148] sm:$0xff] %vm254, %v681
  %746 = vst.msk [vmem:[%s3 + $0x150] sm:$0xff] %vm254, %v682
  %747 = vst.msk [vmem:[%s3 + $0x158] sm:$0xff] %vm254, %v683
  %748 = vst.msk [vmem:[%s3 + $0x160] sm:$0xff] %vm254, %v684
  %749 = vst.msk [vmem:[%s3 + $0x168] sm:$0xff] %vm254, %v685
  %750 = vst.msk [vmem:[%s3 + $0x170] sm:$0xff] %vm254, %v686
  %751 = vst.msk [vmem:[%s3 + $0x178] sm:$0xff] %vm254, %v687
  %752 = vst.msk [vmem:[%s3 + $0x180] sm:$0xff] %vm254, %v688
  %753 = vst.msk [vmem:[%s3 + $0x188] sm:$0xff] %vm254, %v689
  %754 = vst.msk [vmem:[%s3 + $0x190] sm:$0xff] %vm254, %v690
  %755 = vst.msk [vmem:[%s3 + $0x198] sm:$0xff] %vm254, %v691
  %756 = vst.msk [vmem:[%s3 + $0x1a0] sm:$0xff] %vm254, %v692
  %757 = vst.msk [vmem:[%s3 + $0x1a8] sm:$0xff] %vm254, %v693
  %758 = vst.msk [vmem:[%s3 + $0x1b0] sm:$0xff] %vm254, %v694
  %759 = vst.msk [vmem:[%s3 + $0x1b8] sm:$0xff] %vm254, %v695
  %760 = vst.msk [vmem:[%s3 + $0x1c0] sm:$0xff] %vm254, %v696
  %761 = vst.msk [vmem:[%s3 + $0x1c8] sm:$0xff] %vm254, %v697
  %762 = vst.msk [vmem:[%s3 + $0x1d0] sm:$0xff] %vm254, %v698
  %763 = vst.msk [vmem:[%s3 + $0x1d8] sm:$0xff] %vm254, %v699
  %764 = vst.msk [vmem:[%s3 + $0x1e0] sm:$0xff] %vm254, %v700
  %765 = vst.msk [vmem:[%s3 + $0x1e8] sm:$0xff] %vm254, %v701
  %766 = vst.msk [vmem:[%s3 + $0x1f0] sm:$0xff] %vm254, %v702
  %767 = vst.msk [vmem:[%s3 + $0x1f8] sm:$0xff] %vm254, %v703
  // Predicated region
  $region14: #{tpu_custom_call.1} parent=0 // pred_check
    _
  $region15: #{tpu_custom_call.1} parent=0 // pred_check_branch
    %769 = sbr.rel (0) target = $region17
  $region16: #{tpu_custom_call.1} parent=0 // pred_region
    _
  $region17: #{tpu_custom_call.1} parent=0 // pred_fallthru
    _
  // Predicated region
  $region18: #{tpu_custom_call.1} parent=0 // pred_check
    _
  $region19: #{tpu_custom_call.1} parent=0 // pred_check_branch
    %771 = sbr.rel (0) target = $region21
  $region20: #{tpu_custom_call.1} parent=0 // pred_region
    _
  $region21: #{tpu_custom_call.1} parent=0 // pred_fallthru
    _

</llo_original>
